<compile_context>
chip_gen: v7x
topology: tpu7x:2x2x1
jax: 0.10.0
libtpu: 0.0.40
codegen_flags: <defaults>
</compile_context>

<pallas_src>
import functools

import jax
import jax.numpy as jnp
import numpy as np
from jax.experimental import pallas as pl
from jax.experimental.pallas import tpu as pltpu

LEAKY_SLOPE = 0.1  # nn.LeakyReLU(0.1) in the reference module


# ----------------------------------------------------------------------------
# Fused Pallas kernel: whole EnGenVAE forward on one batch tile
# ----------------------------------------------------------------------------
def _linear(h, w_ref, b_ref, *, leaky, slope):
    y = jnp.dot(h, w_ref[...], preferred_element_type=jnp.float32) + b_ref[...]
    if leaky:
        y = jnp.where(y > 0, y, slope * y)
    return y


def _fused_vae_kernel(*refs, n_enc, n_dec, leaky_slope):
    """refs = (x, eps,
               enc_w0, enc_b0, ..., means_w, means_b, logvar_w, logvar_b,
               dec_w0, dec_b0, ...,
               recon_out, means_out, logvar_out, z_out)"""
    n_layers = n_enc + 2 + n_dec
    n_in = 2 + 2 * n_layers
    in_refs = refs[:n_in]
    recon_ref, means_ref, logvar_ref, z_out_ref = refs[n_in:]
    x_ref, eps_ref = in_refs[0], in_refs[1]
    wb = [(in_refs[2 + 2 * j], in_refs[3 + 2 * j]) for j in range(n_layers)]

    # ---- Encoder MLP: Linear + LeakyReLU(0.1) per layer ---------------------
    h = x_ref[...]
    for j in range(n_enc):
        h = _linear(h, *wb[j], leaky=True, slope=leaky_slope)

    # ---- means / log_var heads: same in-register h, read once ---------------
    means = _linear(h, *wb[n_enc], leaky=False, slope=leaky_slope)
    log_var = _linear(h, *wb[n_enc + 1], leaky=False, slope=leaky_slope)

    # ---- Reparameterization: z = eps * exp(0.5 * log_var) + means -----------
    z = eps_ref[...] * jnp.exp(0.5 * log_var) + means  # exp -> EUP slot

    # ---- Decoder MLP: LeakyReLU between layers, none after the last ---------
    d = z
    for j in range(n_dec):
        d = _linear(d, *wb[n_enc + 2 + j], leaky=(j + 1 < n_dec),
                    slope=leaky_slope)

    recon_ref[...] = d
    means_ref[...] = means
    logvar_ref[...] = log_var
    z_out_ref[...] = z


# ----------------------------------------------------------------------------
# Wrapper: one pallas_call for the whole forward
# ----------------------------------------------------------------------------
def engen_vae_forward(params, x, eps, *, batch_block=None):
    B, d_in = x.shape
    latent = eps.shape[1]
    enc_layers = list(params["enc"])
    dec_layers = list(params["dec"])
    n_enc, n_dec = len(enc_layers), len(dec_layers)
    d_out = dec_layers[-1][0].shape[1]

    # Batch tile: at most 256 rows per grid step (MXU-friendly on v6e/v7x),
    # single tile at demo sizes.  Grid axis is "parallel" -> megacore on v7x.
    if batch_block is None:
        batch_block = B if B <= 256 else 256
    assert B % batch_block == 0, "batch must be divisible by batch_block"
    grid = (B // batch_block,)

    layer_list = enc_layers + [params["means"], params["log_var"]] + dec_layers

    operands = [x, eps]
    in_specs = [
        pl.BlockSpec((batch_block, d_in), lambda i: (i, 0)),
        pl.BlockSpec((batch_block, latent), lambda i: (i, 0)),
    ]
    for w, b in layer_list:
        operands += [w, b]
        # Whole weight / bias resident in VMEM for every batch tile.
        in_specs += [
            pl.BlockSpec(w.shape, lambda i: (0, 0)),
            pl.BlockSpec(b.shape, lambda i: (0, 0)),
        ]

    out_shape = (
        jax.ShapeDtypeStruct((B, d_out), jnp.float32),
        jax.ShapeDtypeStruct((B, latent), jnp.float32),
        jax.ShapeDtypeStruct((B, latent), jnp.float32),
        jax.ShapeDtypeStruct((B, latent), jnp.float32),
    )
    out_specs = (
        pl.BlockSpec((batch_block, d_out), lambda i: (i, 0)),
        pl.BlockSpec((batch_block, latent), lambda i: (i, 0)),
        pl.BlockSpec((batch_block, latent), lambda i: (i, 0)),
        pl.BlockSpec((batch_block, latent), lambda i: (i, 0)),
    )

    # Advisory cost hint for XLA scheduling around the fused custom call.
    flops = sum(2 * B * w.shape[0] * w.shape[1] for w, _ in layer_list)
    param_bytes = 4 * sum(int(w.size) + int(b.size) for w, b in layer_list)
    io_bytes = 4 * (int(x.size) + int(eps.size) + B * d_out + 3 * B * latent)
    cost = pl.CostEstimate(flops=flops, transcendentals=B * latent,
                           bytes_accessed=param_bytes + io_bytes)

    kernel = functools.partial(_fused_vae_kernel, n_enc=n_enc, n_dec=n_dec,
                               leaky_slope=LEAKY_SLOPE)
    fused = pl.pallas_call(
        kernel,
        out_shape=out_shape,
        grid=grid,
        in_specs=in_specs,
        out_specs=out_specs,
        compiler_params=pltpu.CompilerParams(
            dimension_semantics=("parallel",)),
        cost_estimate=cost,
    )
    return fused(*operands)


# ----------------------------------------------------------------------------
# Parameter init (matches PyTorch __init__: weight ~ N(0, sqrt(2/in_features)),
# bias = 0; weights stored transposed (in, out), bias stored (1, out))
# ----------------------------------------------------------------------------
def _init_linear(key, in_size, out_size):
    w = jax.random.normal(key, (in_size, out_size), jnp.float32) * np.sqrt(
        2.0 / in_size)
    b = jnp.zeros((1, out_size), jnp.float32)
    return w, b


def init_engen_vae_params(key, encoder_layer_sizes, latent_size,
                          decoder_layer_sizes):
    params = {"enc": [], "dec": []}
    for in_s, out_s in zip(encoder_layer_sizes[:-1], encoder_layer_sizes[1:]):
        key, k = jax.random.split(key)
        params["enc"].append(_init_linear(k, in_s, out_s))
    key, km, kv = jax.random.split(key, 3)
    params["means"] = _init_linear(km, encoder_layer_sizes[-1], latent_size)
    params["log_var"] = _init_linear(kv, encoder_layer_sizes[-1], latent_size)
    for in_s, out_s in zip([latent_size] + decoder_layer_sizes[:-1],
                           decoder_layer_sizes):
        key, k = jax.random.split(key)
        params["dec"].append(_init_linear(k, in_s, out_s))
    return params


# ----------------------------------------------------------------------------
# Pure-JAX reference (for correctness check only)
# ----------------------------------------------------------------------------
def engen_vae_forward_ref(params, x, eps):
    def lin(h, wb):
        w, b = wb
        return jnp.dot(h, w, precision=jax.lax.Precision.HIGHEST) + b

    h = x
    for wb in params["enc"]:
        h = lin(h, wb)
        h = jnp.where(h > 0, h, LEAKY_SLOPE * h)
    means = lin(h, params["means"])
    log_var = lin(h, params["log_var"])
    z = eps * jnp.exp(0.5 * log_var) + means
    d = z
    n_dec = len(params["dec"])
    for i, wb in enumerate(params["dec"]):
        d = lin(d, wb)
        if i + 1 < n_dec:
            d = jnp.where(d > 0, d, LEAKY_SLOPE * d)
    return d, means, log_var, z


# ----------------------------------------------------------------------------
if __name__ == "__main__":
    batch = 8
    encoder_layer_sizes = [32, 16]   # input dim 32, one hidden layer of 16
    latent_size = 8
    decoder_layer_sizes = [16, 32]   # hidden 16, reconstruct 32 features

    key = jax.random.PRNGKey(0)
    key, kp, kx, ke = jax.random.split(key, 4)

    params = init_engen_vae_params(kp, encoder_layer_sizes, latent_size,
                                   decoder_layer_sizes)
    x = jax.random.normal(kx, (batch, encoder_layer_sizes[0]), jnp.float32)
    # torch.randn([batch, latent_size]) equivalent (deterministic, passed in)
    eps = jax.random.normal(ke, (batch, latent_size), jnp.float32)

    recon_x, means, log_var, z = engen_vae_forward(params, x, eps)
    jax.block_until_ready((recon_x, means, log_var, z))

    assert recon_x.shape == (batch, decoder_layer_sizes[-1])
    assert means.shape == (batch, latent_size)
    assert log_var.shape == (batch, latent_size)
    assert z.shape == (batch, latent_size)

    # Numerical check against pure-JAX reference of the same forward.
    r_ref, m_ref, lv_ref, z_ref = engen_vae_forward_ref(params, x, eps)
    np.testing.assert_allclose(np.asarray(means), np.asarray(m_ref),
                               rtol=1e-3, atol=1e-3)
    np.testing.assert_allclose(np.asarray(log_var), np.asarray(lv_ref),
                               rtol=1e-3, atol=1e-3)
    np.testing.assert_allclose(np.asarray(z), np.asarray(z_ref),
                               rtol=1e-3, atol=1e-3)
    np.testing.assert_allclose(np.asarray(recon_x), np.asarray(r_ref),
                               rtol=1e-3, atol=1e-3)

    print("KERNEL_OK")
</pallas_src>

<mosaic_0001>
module attributes {stable_mosaic.version = 11 : i64} {
  func.func @_fused_vae_kernel(%arg0: i32, %arg1: memref<8x32xf32, #tpu.memory_space<vmem>>, %arg2: memref<8x8xf32, #tpu.memory_space<vmem>>, %arg3: memref<32x16xf32, #tpu.memory_space<vmem>>, %arg4: memref<1x16xf32, #tpu.memory_space<vmem>>, %arg5: memref<16x8xf32, #tpu.memory_space<vmem>>, %arg6: memref<1x8xf32, #tpu.memory_space<vmem>>, %arg7: memref<16x8xf32, #tpu.memory_space<vmem>>, %arg8: memref<1x8xf32, #tpu.memory_space<vmem>>, %arg9: memref<8x16xf32, #tpu.memory_space<vmem>>, %arg10: memref<1x16xf32, #tpu.memory_space<vmem>>, %arg11: memref<16x32xf32, #tpu.memory_space<vmem>>, %arg12: memref<1x32xf32, #tpu.memory_space<vmem>>, %arg13: memref<8x32xf32, #tpu.memory_space<vmem>>, %arg14: memref<8x8xf32, #tpu.memory_space<vmem>>, %arg15: memref<8x8xf32, #tpu.memory_space<vmem>>, %arg16: memref<8x8xf32, #tpu.memory_space<vmem>>) attributes {dimension_semantics = [#tpu.dimension_semantics<parallel>], iteration_bounds = array<i64: 1>, scalar_prefetch = 0 : i64, scratch_operands = 0 : i64, tpu.core_type = #tpu.core_type<tc>, window_params = [{transform_indices = @transform_0, window_bounds = array<i64: 8, 32>}, {transform_indices = @transform_1, window_bounds = array<i64: 8, 8>}, {pipeline_mode = #tpu.pipeline_mode<synchronous>, transform_indices = @transform_2, window_bounds = array<i64: 32, 16>}, {pipeline_mode = #tpu.pipeline_mode<synchronous>, transform_indices = @transform_3, window_bounds = array<i64: 1, 16>}, {pipeline_mode = #tpu.pipeline_mode<synchronous>, transform_indices = @transform_4, window_bounds = array<i64: 16, 8>}, {pipeline_mode = #tpu.pipeline_mode<synchronous>, transform_indices = @transform_5, window_bounds = array<i64: 1, 8>}, {pipeline_mode = #tpu.pipeline_mode<synchronous>, transform_indices = @transform_6, window_bounds = array<i64: 16, 8>}, {pipeline_mode = #tpu.pipeline_mode<synchronous>, transform_indices = @transform_7, window_bounds = array<i64: 1, 8>}, {pipeline_mode = #tpu.pipeline_mode<synchronous>, transform_indices = @transform_8, window_bounds = array<i64: 8, 16>}, {pipeline_mode = #tpu.pipeline_mode<synchronous>, transform_indices = @transform_9, window_bounds = array<i64: 1, 16>}, {pipeline_mode = #tpu.pipeline_mode<synchronous>, transform_indices = @transform_10, window_bounds = array<i64: 16, 32>}, {pipeline_mode = #tpu.pipeline_mode<synchronous>, transform_indices = @transform_11, window_bounds = array<i64: 1, 32>}, {transform_indices = @transform_12, window_bounds = array<i64: 8, 32>}, {transform_indices = @transform_13, window_bounds = array<i64: 8, 8>}, {transform_indices = @transform_14, window_bounds = array<i64: 8, 8>}, {transform_indices = @transform_15, window_bounds = array<i64: 8, 8>}]} {
    %c0 = arith.constant 0 : index
    %c0_0 = arith.constant 0 : index
    %0 = vector.load %arg1[%c0, %c0_0] : memref<8x32xf32, #tpu.memory_space<vmem>>, vector<8x32xf32>
    %c0_1 = arith.constant 0 : index
    %c0_2 = arith.constant 0 : index
    %1 = vector.load %arg3[%c0_1, %c0_2] : memref<32x16xf32, #tpu.memory_space<vmem>>, vector<32x16xf32>
    %cst = arith.constant dense<0.000000e+00> : vector<8x16xf32>
    %2 = tpu.matmul %0, %1, %cst {dimension_numbers = #tpu.dot_dimension_numbers<[1], [0], [0], [1], [0, 0, 1, 1], [], []>} : vector<8x32xf32>, vector<32x16xf32>, vector<8x16xf32> -> vector<8x16xf32>
    %c0_3 = arith.constant 0 : index
    %c0_4 = arith.constant 0 : index
    %3 = vector.load %arg4[%c0_3, %c0_4] : memref<1x16xf32, #tpu.memory_space<vmem>>, vector<1x16xf32>
    %4 = vector.broadcast %3 : vector<1x16xf32> to vector<8x16xf32>
    %5 = arith.addf %2, %4 : vector<8x16xf32>
    %cst_5 = arith.constant 0.000000e+00 : f32
    %6 = vector.broadcast %cst_5 : f32 to vector<8x16xf32>
    %7 = arith.cmpf ogt, %5, %6 : vector<8x16xf32>
    %cst_6 = arith.constant 1.000000e-01 : f32
    %8 = vector.broadcast %cst_6 : f32 to vector<8x16xf32>
    %9 = arith.mulf %8, %5 : vector<8x16xf32>
    %10 = arith.select %7, %5, %9 : vector<8x16xi1>, vector<8x16xf32>
    %c0_7 = arith.constant 0 : index
    %c0_8 = arith.constant 0 : index
    %11 = vector.load %arg5[%c0_7, %c0_8] : memref<16x8xf32, #tpu.memory_space<vmem>>, vector<16x8xf32>
    %cst_9 = arith.constant dense<0.000000e+00> : vector<8x8xf32>
    %12 = tpu.matmul %10, %11, %cst_9 {dimension_numbers = #tpu.dot_dimension_numbers<[1], [0], [0], [1], [0, 0, 1, 1], [], []>} : vector<8x16xf32>, vector<16x8xf32>, vector<8x8xf32> -> vector<8x8xf32>
    %c0_10 = arith.constant 0 : index
    %c0_11 = arith.constant 0 : index
    %13 = vector.load %arg6[%c0_10, %c0_11] : memref<1x8xf32, #tpu.memory_space<vmem>>, vector<1x8xf32>
    %14 = vector.broadcast %13 : vector<1x8xf32> to vector<8x8xf32>
    %15 = arith.addf %12, %14 : vector<8x8xf32>
    %c0_12 = arith.constant 0 : index
    %c0_13 = arith.constant 0 : index
    %16 = vector.load %arg7[%c0_12, %c0_13] : memref<16x8xf32, #tpu.memory_space<vmem>>, vector<16x8xf32>
    %cst_14 = arith.constant dense<0.000000e+00> : vector<8x8xf32>
    %17 = tpu.matmul %10, %16, %cst_14 {dimension_numbers = #tpu.dot_dimension_numbers<[1], [0], [0], [1], [0, 0, 1, 1], [], []>} : vector<8x16xf32>, vector<16x8xf32>, vector<8x8xf32> -> vector<8x8xf32>
    %c0_15 = arith.constant 0 : index
    %c0_16 = arith.constant 0 : index
    %18 = vector.load %arg8[%c0_15, %c0_16] : memref<1x8xf32, #tpu.memory_space<vmem>>, vector<1x8xf32>
    %19 = vector.broadcast %18 : vector<1x8xf32> to vector<8x8xf32>
    %20 = arith.addf %17, %19 : vector<8x8xf32>
    %c0_17 = arith.constant 0 : index
    %c0_18 = arith.constant 0 : index
    %21 = vector.load %arg2[%c0_17, %c0_18] : memref<8x8xf32, #tpu.memory_space<vmem>>, vector<8x8xf32>
    %cst_19 = arith.constant 5.000000e-01 : f32
    %22 = vector.broadcast %cst_19 : f32 to vector<8x8xf32>
    %23 = arith.mulf %22, %20 : vector<8x8xf32>
    %24 = math.exp %23 : vector<8x8xf32>
    %25 = arith.mulf %21, %24 : vector<8x8xf32>
    %26 = arith.addf %25, %15 : vector<8x8xf32>
    %c0_20 = arith.constant 0 : index
    %c0_21 = arith.constant 0 : index
    %27 = vector.load %arg9[%c0_20, %c0_21] : memref<8x16xf32, #tpu.memory_space<vmem>>, vector<8x16xf32>
    %cst_22 = arith.constant dense<0.000000e+00> : vector<8x16xf32>
    %28 = tpu.matmul %26, %27, %cst_22 {dimension_numbers = #tpu.dot_dimension_numbers<[1], [0], [0], [1], [0, 0, 1, 1], [], []>} : vector<8x8xf32>, vector<8x16xf32>, vector<8x16xf32> -> vector<8x16xf32>
    %c0_23 = arith.constant 0 : index
    %c0_24 = arith.constant 0 : index
    %29 = vector.load %arg10[%c0_23, %c0_24] : memref<1x16xf32, #tpu.memory_space<vmem>>, vector<1x16xf32>
    %30 = vector.broadcast %29 : vector<1x16xf32> to vector<8x16xf32>
    %31 = arith.addf %28, %30 : vector<8x16xf32>
    %cst_25 = arith.constant 0.000000e+00 : f32
    %32 = vector.broadcast %cst_25 : f32 to vector<8x16xf32>
    %33 = arith.cmpf ogt, %31, %32 : vector<8x16xf32>
    %cst_26 = arith.constant 1.000000e-01 : f32
    %34 = vector.broadcast %cst_26 : f32 to vector<8x16xf32>
    %35 = arith.mulf %34, %31 : vector<8x16xf32>
    %36 = arith.select %33, %31, %35 : vector<8x16xi1>, vector<8x16xf32>
    %c0_27 = arith.constant 0 : index
    %c0_28 = arith.constant 0 : index
    %37 = vector.load %arg11[%c0_27, %c0_28] : memref<16x32xf32, #tpu.memory_space<vmem>>, vector<16x32xf32>
    %cst_29 = arith.constant dense<0.000000e+00> : vector<8x32xf32>
    %38 = tpu.matmul %36, %37, %cst_29 {dimension_numbers = #tpu.dot_dimension_numbers<[1], [0], [0], [1], [0, 0, 1, 1], [], []>} : vector<8x16xf32>, vector<16x32xf32>, vector<8x32xf32> -> vector<8x32xf32>
    %c0_30 = arith.constant 0 : index
    %c0_31 = arith.constant 0 : index
    %39 = vector.load %arg12[%c0_30, %c0_31] : memref<1x32xf32, #tpu.memory_space<vmem>>, vector<1x32xf32>
    %40 = vector.broadcast %39 : vector<1x32xf32> to vector<8x32xf32>
    %41 = arith.addf %38, %40 : vector<8x32xf32>
    %c0_32 = arith.constant 0 : index
    %c0_33 = arith.constant 0 : index
    %42 = vector.load %arg13[%c0_32, %c0_33] : memref<8x32xf32, #tpu.memory_space<vmem>>, vector<8x32xf32>
    tpu.vector_store %arg13[%c0_32, %c0_33], %41 {strides = array<i32>} : memref<8x32xf32, #tpu.memory_space<vmem>>, vector<8x32xf32>,
    %c0_34 = arith.constant 0 : index
    %c0_35 = arith.constant 0 : index
    %43 = vector.load %arg14[%c0_34, %c0_35] : memref<8x8xf32, #tpu.memory_space<vmem>>, vector<8x8xf32>
    tpu.vector_store %arg14[%c0_34, %c0_35], %15 {strides = array<i32>} : memref<8x8xf32, #tpu.memory_space<vmem>>, vector<8x8xf32>,
    %c0_36 = arith.constant 0 : index
    %c0_37 = arith.constant 0 : index
    %44 = vector.load %arg15[%c0_36, %c0_37] : memref<8x8xf32, #tpu.memory_space<vmem>>, vector<8x8xf32>
    tpu.vector_store %arg15[%c0_36, %c0_37], %20 {strides = array<i32>} : memref<8x8xf32, #tpu.memory_space<vmem>>, vector<8x8xf32>,
    %c0_38 = arith.constant 0 : index
    %c0_39 = arith.constant 0 : index
    %45 = vector.load %arg16[%c0_38, %c0_39] : memref<8x8xf32, #tpu.memory_space<vmem>>, vector<8x8xf32>
    tpu.vector_store %arg16[%c0_38, %c0_39], %26 {strides = array<i32>} : memref<8x8xf32, #tpu.memory_space<vmem>>, vector<8x8xf32>,
    return
  }
  func.func @transform_0(%arg0: i32) -> (i32, i32) {
    %c0_i32 = arith.constant 0 : i32
    %c0_i32_0 = arith.constant 0 : i32
    return %arg0, %c0_i32 : i32, i32
  }
  func.func @transform_1(%arg0: i32) -> (i32, i32) {
    %c0_i32 = arith.constant 0 : i32
    %c0_i32_0 = arith.constant 0 : i32
    return %arg0, %c0_i32 : i32, i32
  }
  func.func @transform_2(%arg0: i32) -> (i32, i32) {
    %c0_i32 = arith.constant 0 : i32
    %c0_i32_0 = arith.constant 0 : i32
    %c0_i32_1 = arith.constant 0 : i32
    return %c0_i32, %c0_i32_0 : i32, i32
  }
  func.func @transform_3(%arg0: i32) -> (i32, i32) {
    %c0_i32 = arith.constant 0 : i32
    %c0_i32_0 = arith.constant 0 : i32
    %c0_i32_1 = arith.constant 0 : i32
    return %c0_i32, %c0_i32_0 : i32, i32
  }
  func.func @transform_4(%arg0: i32) -> (i32, i32) {
    %c0_i32 = arith.constant 0 : i32
    %c0_i32_0 = arith.constant 0 : i32
    %c0_i32_1 = arith.constant 0 : i32
    return %c0_i32, %c0_i32_0 : i32, i32
  }
  func.func @transform_5(%arg0: i32) -> (i32, i32) {
    %c0_i32 = arith.constant 0 : i32
    %c0_i32_0 = arith.constant 0 : i32
    %c0_i32_1 = arith.constant 0 : i32
    return %c0_i32, %c0_i32_0 : i32, i32
  }
  func.func @transform_6(%arg0: i32) -> (i32, i32) {
    %c0_i32 = arith.constant 0 : i32
    %c0_i32_0 = arith.constant 0 : i32
    %c0_i32_1 = arith.constant 0 : i32
    return %c0_i32, %c0_i32_0 : i32, i32
  }
  func.func @transform_7(%arg0: i32) -> (i32, i32) {
    %c0_i32 = arith.constant 0 : i32
    %c0_i32_0 = arith.constant 0 : i32
    %c0_i32_1 = arith.constant 0 : i32
    return %c0_i32, %c0_i32_0 : i32, i32
  }
  func.func @transform_8(%arg0: i32) -> (i32, i32) {
    %c0_i32 = arith.constant 0 : i32
    %c0_i32_0 = arith.constant 0 : i32
    %c0_i32_1 = arith.constant 0 : i32
    return %c0_i32, %c0_i32_0 : i32, i32
  }
  func.func @transform_9(%arg0: i32) -> (i32, i32) {
    %c0_i32 = arith.constant 0 : i32
    %c0_i32_0 = arith.constant 0 : i32
    %c0_i32_1 = arith.constant 0 : i32
    return %c0_i32, %c0_i32_0 : i32, i32
  }
  func.func @transform_10(%arg0: i32) -> (i32, i32) {
    %c0_i32 = arith.constant 0 : i32
    %c0_i32_0 = arith.constant 0 : i32
    %c0_i32_1 = arith.constant 0 : i32
    return %c0_i32, %c0_i32_0 : i32, i32
  }
  func.func @transform_11(%arg0: i32) -> (i32, i32) {
    %c0_i32 = arith.constant 0 : i32
    %c0_i32_0 = arith.constant 0 : i32
    %c0_i32_1 = arith.constant 0 : i32
    return %c0_i32, %c0_i32_0 : i32, i32
  }
  func.func @transform_12(%arg0: i32) -> (i32, i32) {
    %c0_i32 = arith.constant 0 : i32
    %c0_i32_0 = arith.constant 0 : i32
    return %arg0, %c0_i32 : i32, i32
  }
  func.func @transform_13(%arg0: i32) -> (i32, i32) {
    %c0_i32 = arith.constant 0 : i32
    %c0_i32_0 = arith.constant 0 : i32
    return %arg0, %c0_i32 : i32, i32
  }
  func.func @transform_14(%arg0: i32) -> (i32, i32) {
    %c0_i32 = arith.constant 0 : i32
    %c0_i32_0 = arith.constant 0 : i32
    return %arg0, %c0_i32 : i32, i32
  }
  func.func @transform_15(%arg0: i32) -> (i32, i32) {
    %c0_i32 = arith.constant 0 : i32
    %c0_i32_0 = arith.constant 0 : i32
    return %arg0, %c0_i32 : i32, i32
  }
}

</mosaic_0001>

<llo_original>
// kernel: tpu_custom_call.1
$region0: #{tpu_custom_call.1}
  #allocation0 [shape = 'u32[]', space=smem, size = 0x4, offset = 0x4, fixed_abs, tag = 'smem constant byte address 0x4 - core index']
  #allocation1 [shape = 'u32[144,128]{1,0:T(1,128)}', space=vmem, size = 0x12000, scoped, tag = 'internal scratch']
  %s0 = inlined_call_operand.vmem [shape: f32[8,32], index: 0, kind: input, shape index: {}]
  %s1 = inlined_call_operand.vmem [shape: f32[8,8], index: 1, kind: input, shape index: {}]
  %s2 = inlined_call_operand.vmem [shape: f32[32,16], index: 2, kind: input, shape index: {}]
  %s3 = inlined_call_operand.vmem [shape: f32[1,16], index: 3, kind: input, shape index: {}]
  %s4 = inlined_call_operand.vmem [shape: f32[16,8], index: 4, kind: input, shape index: {}]
  %s5 = inlined_call_operand.vmem [shape: f32[1,8], index: 5, kind: input, shape index: {}]
  %s6 = inlined_call_operand.vmem [shape: f32[16,8], index: 6, kind: input, shape index: {}]
  %s7 = inlined_call_operand.vmem [shape: f32[1,8], index: 7, kind: input, shape index: {}]
  %s8 = inlined_call_operand.vmem [shape: f32[8,16], index: 8, kind: input, shape index: {}]
  %s9 = inlined_call_operand.vmem [shape: f32[1,16], index: 9, kind: input, shape index: {}]
  %s10 = inlined_call_operand.vmem [shape: f32[16,32], index: 10, kind: input, shape index: {}]
  %s11 = inlined_call_operand.vmem [shape: f32[1,32], index: 11, kind: input, shape index: {}]
  %s12 = inlined_call_operand.hbm [shape: f32[8,32], index: 12, kind: output, shape index: {0}]
  %s13 = inlined_call_operand.hbm [shape: f32[8,8], index: 13, kind: output, shape index: {1}]
  %s14 = inlined_call_operand.hbm [shape: f32[8,8], index: 14, kind: output, shape index: {2}]
  %s15 = inlined_call_operand.hbm [shape: f32[8,8], index: 15, kind: output, shape index: {3}]
  %16 = xla_tuple %s12, %s13, %s14, %s15
  %s17 = sld [smem:[#allocation0]]
  $region82: #{tpu_custom_call.1} parent=0
    _
  %s19 = ssub.s32 1, %s17
  %s20 = scalar_select 0, %s19, %s17
  $region1: #{tpu_custom_call.1} parent=0
    #allocation2 [shape = 'u8[4096]{0}', space=vmem, size = 0x1000, scoped, tag = 'output window, operand 0, single buffered']
    #allocation3 [shape = 's32[1]{0}', space=sflag, size = 0x4, scoped, tag = 'scoped memory for tpu_custom_call.1']
    #allocation4 [shape = 'u8[4096]{0}', space=vmem, size = 0x1000, scoped, tag = 'output window, operand 1, single buffered']
    #allocation5 [shape = 's32[1]{0}', space=sflag, size = 0x4, scoped, tag = 'scoped memory for tpu_custom_call.1']
    #allocation6 [shape = 'u8[4096]{0}', space=vmem, size = 0x1000, scoped, tag = 'output window, operand 2, single buffered']
    #allocation7 [shape = 'u8[4096]{0}', space=vmem, size = 0x1000, scoped, tag = 'output window, operand 3, single buffered']
    #allocation8 [shape = 's32[1]{0}', space=sflag, size = 0x4, scoped, tag = 'scoped memory for tpu_custom_call.1']
    %21 = vsyncpa [#allocation3], 0
    %22 = vsyncpa [#allocation5], 0
    %23 = vsyncpa [#allocation8], 0
    // Predicated region
    $region2: #{tpu_custom_call.1} parent=1 // pred_check
      _
    $region3: #{tpu_custom_call.1} parent=1 // pred_check_branch
      %25 = sbr.rel (0) target = $region5
    $region4: #{tpu_custom_call.1} parent=1 // pred_region
      _
    $region5: #{tpu_custom_call.1} parent=1 // pred_fallthru
      _
    // Predicated region
    $region6: #{tpu_custom_call.1} parent=1 // pred_check
      _
    $region7: #{tpu_custom_call.1} parent=1 // pred_check_branch
      %27 = sbr.rel (0) target = $region9
    $region8: #{tpu_custom_call.1} parent=1 // pred_region
      _
    $region9: #{tpu_custom_call.1} parent=1 // pred_fallthru
      _
    // Predicated region
    $region10: #{tpu_custom_call.1} parent=1 // pred_check
      _
    $region11: #{tpu_custom_call.1} parent=1 // pred_check_branch
      %29 = sbr.rel (0) target = $region13
    $region12: #{tpu_custom_call.1} parent=1 // pred_region
      _
    $region13: #{tpu_custom_call.1} parent=1 // pred_fallthru
      _
    // Predicated region
    $region14: #{tpu_custom_call.1} parent=1 // pred_check
      _
    $region15: #{tpu_custom_call.1} parent=1 // pred_check_branch
      %31 = sbr.rel (0) target = $region17
    $region16: #{tpu_custom_call.1} parent=1 // pred_region
      _
    $region17: #{tpu_custom_call.1} parent=1 // pred_fallthru
      _
    // Predicated region
    $region18: #{tpu_custom_call.1} parent=1 // pred_check
      _
    $region19: #{tpu_custom_call.1} parent=1 // pred_check_branch
      %33 = sbr.rel (0) target = $region21
    $region20: #{tpu_custom_call.1} parent=1 // pred_region
      _
    $region21: #{tpu_custom_call.1} parent=1 // pred_fallthru
      _
    // Predicated region
    $region22: #{tpu_custom_call.1} parent=1 // pred_check
      _
    $region23: #{tpu_custom_call.1} parent=1 // pred_check_branch
      %35 = sbr.rel (0) target = $region25
    $region24: #{tpu_custom_call.1} parent=1 // pred_region
      _
    $region25: #{tpu_custom_call.1} parent=1 // pred_fallthru
      _
    // Predicated region
    $region26: #{tpu_custom_call.1} parent=1 // pred_check
      _
    $region27: #{tpu_custom_call.1} parent=1 // pred_check_branch
      %37 = sbr.rel (0) target = $region29
    $region28: #{tpu_custom_call.1} parent=1 // pred_region
      _
    $region29: #{tpu_custom_call.1} parent=1 // pred_fallthru
      _
    // Predicated region
    $region30: #{tpu_custom_call.1} parent=1 // pred_check
      _
    $region31: #{tpu_custom_call.1} parent=1 // pred_check_branch
      %39 = sbr.rel (0) target = $region33
    $region32: #{tpu_custom_call.1} parent=1 // pred_region
      _
    $region33: #{tpu_custom_call.1} parent=1 // pred_fallthru
      _
    // Predicated region
    $region34: #{tpu_custom_call.1} parent=1 // pred_check
      _
    $region35: #{tpu_custom_call.1} parent=1 // pred_check_branch
      %41 = sbr.rel (0) target = $region37
    $region36: #{tpu_custom_call.1} parent=1 // pred_region
      _
    $region37: #{tpu_custom_call.1} parent=1 // pred_fallthru
      _
    // Predicated region
    $region38: #{tpu_custom_call.1} parent=1 // pred_check
      _
    $region39: #{tpu_custom_call.1} parent=1 // pred_check_branch
      %43 = sbr.rel (0) target = $region41
    $region40: #{tpu_custom_call.1} parent=1 // pred_region
      _
    $region41: #{tpu_custom_call.1} parent=1 // pred_fallthru
      _
    // Predicated region
    $region42: #{tpu_custom_call.1} parent=1 // pred_check
      _
    $region43: #{tpu_custom_call.1} parent=1 // pred_check_branch
      %45 = sbr.rel (0) target = $region45
    $region44: #{tpu_custom_call.1} parent=1 // pred_region
      _
    $region45: #{tpu_custom_call.1} parent=1 // pred_fallthru
      _
    // Predicated region
    $region46: #{tpu_custom_call.1} parent=1 // pred_check
      _
    $region47: #{tpu_custom_call.1} parent=1 // pred_check_branch
      %47 = sbr.rel (0) target = $region49
    $region48: #{tpu_custom_call.1} parent=1 // pred_region
      _
    $region49: #{tpu_custom_call.1} parent=1 // pred_fallthru
      _
    %v48 = vld [vmem:[%s0] sm:$0xff]
    %v49 = vld [vmem:[%s2] sm:$0xff]
    %v50 = vld [vmem:[%s2 + $0x8] sm:$0xff]
    %v51 = vld [vmem:[%s2 + $0x10] sm:$0xff]
    %v52 = vld [vmem:[%s2 + $0x18] sm:$0xff]
    %v53 = vld [vmem:[%s3] sm:$0x1]
    %v55 = vlaneseq
    %v56 = vshrl.u32 %v55, 7
    %v57 = vsub.s32 0, %v56
    %v58 = vrot.slane %v53, %v57
    %vm60 = vcmask 261120
    %v62 = vsel %vm60, %v48, 0
    %64 = vmatprep.subr.mxu0 0.0
    %65 = vmatpush1.msra.mxu0 %v49
    %66 = vmatprep.subr.mxu0 0.0
    %67 = vmatpush1.msra.mxu0 %v50
    %68 = vmatprep.subr.mxu0 0.0
    %69 = vmatpush1.msra.mxu0 %v51
    %70 = vmatprep.subr.mxu0 0.0
    %71 = vmatpush1.msra.mxu0 %v52
    %72 = vmatprep.subr.mxu0 0.0
    %73 = vmatpush1.msra.mxu0 0.0
    %74 = vmatprep.subr.mxu0 0.0
    %75 = vmatpush1.msra.mxu0 0.0
    %76 = vmatprep.subr.mxu0 0.0
    %77 = vmatpush1.msra.mxu0 0.0
    %78 = vmatprep.subr.mxu0 0.0
    %79 = vmatpush1.msra.mxu0 0.0
    %80 = vmatprep.subr.mxu0 0.0
    %81 = vmatpush1.msra.mxu0 0.0
    %82 = vmatprep.subr.mxu0 0.0
    %83 = vmatpush1.msra.mxu0 0.0
    %84 = vmatprep.subr.mxu0 0.0
    %85 = vmatpush1.msra.mxu0 0.0
    %86 = vmatprep.subr.mxu0 0.0
    %87 = vmatpush1.msra.mxu0 0.0
    %88 = vmatprep.subr.mxu0 0.0
    %89 = vmatpush1.msra.mxu0 0.0
    %90 = vmatprep.subr.mxu0 0.0
    %91 = vmatpush1.msra.mxu0 0.0
    %92 = vmatprep.subr.mxu0 0.0
    %93 = vmatpush1.msra.mxu0 0.0
    %94 = vmatprep.subr.mxu0 0.0
    %95 = vmatpush1.msra.mxu0 0.0
    %96 = vmatprep.subr.mxu0 0.0
    %97 = vmatpush1.msra.mxu0 0.0
    %98 = vmatprep.subr.mxu0 0.0
    %99 = vmatpush1.msra.mxu0 0.0
    %100 = vmatprep.subr.mxu0 0.0
    %101 = vmatpush1.msra.mxu0 0.0
    %102 = vmatprep.subr.mxu0 0.0
    %103 = vmatpush1.msra.mxu0 0.0
    %104 = vmatprep.subr.mxu0 0.0
    %105 = vmatpush1.msra.mxu0 0.0
    %106 = vmatprep.subr.mxu0 0.0
    %107 = vmatpush1.msra.mxu0 0.0
    %108 = vmatprep.subr.mxu0 0.0
    %109 = vmatpush1.msra.mxu0 0.0
    %110 = vmatprep.subr.mxu0 0.0
    %111 = vmatpush1.msra.mxu0 0.0
    %112 = vmatprep.subr.mxu0 0.0
    %113 = vmatpush1.msra.mxu0 0.0
    %114 = vmatprep.subr.mxu0 0.0
    %115 = vmatpush1.msra.mxu0 0.0
    %116 = vmatprep.subr.mxu0 0.0
    %117 = vmatpush1.msra.mxu0 0.0
    %118 = vmatprep.subr.mxu0 0.0
    %119 = vmatpush1.msra.mxu0 0.0
    %120 = vmatprep.subr.mxu0 0.0
    %121 = vmatpush1.msra.mxu0 0.0
    %122 = vmatprep.subr.mxu0 0.0
    %123 = vmatpush1.msra.mxu0 0.0
    %124 = vmatprep.subr.mxu0 0.0
    %125 = vmatpush1.msra.mxu0 0.0
    %126 = vmatprep.subr.mxu0 0.0
    %127 = vmatpush1.msra.mxu0 0.0
    %128 = vmatprep.mubr.f32.mxu0 0.0
    %129 = vmatmul.mubr.f32.gmra.mrb[0].mxu0 %v62
    %v130 = vpop.f32.mrb[0].mxu0
    %v131 = vadd.f32 %v58, %v130
    %v132 = vpop.f32.mrb[0].mxu0
    %133 = vdwg.mxu0
    %vm134 = vcmp.gt.f32.partialorder %v131, 0.0
    %v135 = vmul.f32 %v131, 0.1
    %v136 = vsel %vm134, %v131, %v135
    %v137 = vld [vmem:[%s4] sm:$0xff]
    %v138 = vld [vmem:[%s4 + $0x8] sm:$0xff]
    %v139 = vld [vmem:[%s5] sm:$0x1]
    %v141 = vlaneseq
    %v142 = vshrl.u32 %v141, 7
    %v143 = vsub.s32 0, %v142
    %v144 = vrot.slane %v139, %v143
    %vm146 = vcmask 130048
    %v148 = vsel %vm146, %v136, 0
    %150 = vmatprep.subr.mxu0 0.0
    %151 = vmatpush1.msra.mxu0 %v137
    %152 = vmatprep.subr.mxu0 0.0
    %153 = vmatpush1.msra.mxu0 %v138
    %154 = vmatprep.subr.mxu0 0.0
    %155 = vmatpush1.msra.mxu0 0.0
    %156 = vmatprep.subr.mxu0 0.0
    %157 = vmatpush1.msra.mxu0 0.0
    %158 = vmatprep.subr.mxu0 0.0
    %159 = vmatpush1.msra.mxu0 0.0
    %160 = vmatprep.subr.mxu0 0.0
    %161 = vmatpush1.msra.mxu0 0.0
    %162 = vmatprep.subr.mxu0 0.0
    %163 = vmatpush1.msra.mxu0 0.0
    %164 = vmatprep.subr.mxu0 0.0
    %165 = vmatpush1.msra.mxu0 0.0
    %166 = vmatprep.subr.mxu0 0.0
    %167 = vmatpush1.msra.mxu0 0.0
    %168 = vmatprep.subr.mxu0 0.0
    %169 = vmatpush1.msra.mxu0 0.0
    %170 = vmatprep.subr.mxu0 0.0
    %171 = vmatpush1.msra.mxu0 0.0
    %172 = vmatprep.subr.mxu0 0.0
    %173 = vmatpush1.msra.mxu0 0.0
    %174 = vmatprep.subr.mxu0 0.0
    %175 = vmatpush1.msra.mxu0 0.0
    %176 = vmatprep.subr.mxu0 0.0
    %177 = vmatpush1.msra.mxu0 0.0
    %178 = vmatprep.subr.mxu0 0.0
    %179 = vmatpush1.msra.mxu0 0.0
    %180 = vmatprep.subr.mxu0 0.0
    %181 = vmatpush1.msra.mxu0 0.0
    %182 = vmatprep.subr.mxu0 0.0
    %183 = vmatpush1.msra.mxu0 0.0
    %184 = vmatprep.subr.mxu0 0.0
    %185 = vmatpush1.msra.mxu0 0.0
    %186 = vmatprep.subr.mxu0 0.0
    %187 = vmatpush1.msra.mxu0 0.0
    %188 = vmatprep.subr.mxu0 0.0
    %189 = vmatpush1.msra.mxu0 0.0
    %190 = vmatprep.subr.mxu0 0.0
    %191 = vmatpush1.msra.mxu0 0.0
    %192 = vmatprep.subr.mxu0 0.0
    %193 = vmatpush1.msra.mxu0 0.0
    %194 = vmatprep.subr.mxu0 0.0
    %195 = vmatpush1.msra.mxu0 0.0
    %196 = vmatprep.subr.mxu0 0.0
    %197 = vmatpush1.msra.mxu0 0.0
    %198 = vmatprep.subr.mxu0 0.0
    %199 = vmatpush1.msra.mxu0 0.0
    %200 = vmatprep.subr.mxu0 0.0
    %201 = vmatpush1.msra.mxu0 0.0
    %202 = vmatprep.subr.mxu0 0.0
    %203 = vmatpush1.msra.mxu0 0.0
    %204 = vmatprep.subr.mxu0 0.0
    %205 = vmatpush1.msra.mxu0 0.0
    %206 = vmatprep.subr.mxu0 0.0
    %207 = vmatpush1.msra.mxu0 0.0
    %208 = vmatprep.subr.mxu0 0.0
    %209 = vmatpush1.msra.mxu0 0.0
    %210 = vmatprep.subr.mxu0 0.0
    %211 = vmatpush1.msra.mxu0 0.0
    %212 = vmatprep.subr.mxu0 0.0
    %213 = vmatpush1.msra.mxu0 0.0
    %214 = vmatprep.mubr.f32.mxu0 0.0
    %215 = vmatmul.mubr.f32.gmra.mrb[0].mxu0 %v148
    %v216 = vpop.f32.mrb[0].mxu0
    %v217 = vadd.f32 %v144, %v216
    %v218 = vpop.f32.mrb[0].mxu0
    %219 = vdwg.mxu0
    %v220 = vld [vmem:[%s6] sm:$0xff]
    %v221 = vld [vmem:[%s6 + $0x8] sm:$0xff]
    %v222 = vld [vmem:[%s7] sm:$0x1]
    %v224 = vlaneseq
    %v225 = vshrl.u32 %v224, 7
    %v226 = vsub.s32 0, %v225
    %v227 = vrot.slane %v222, %v226
    %229 = vmatprep.subr.mxu0 0.0
    %230 = vmatpush1.msra.mxu0 %v220
    %231 = vmatprep.subr.mxu0 0.0
    %232 = vmatpush1.msra.mxu0 %v221
    %233 = vmatprep.subr.mxu0 0.0
    %234 = vmatpush1.msra.mxu0 0.0
    %235 = vmatprep.subr.mxu0 0.0
    %236 = vmatpush1.msra.mxu0 0.0
    %237 = vmatprep.subr.mxu0 0.0
    %238 = vmatpush1.msra.mxu0 0.0
    %239 = vmatprep.subr.mxu0 0.0
    %240 = vmatpush1.msra.mxu0 0.0
    %241 = vmatprep.subr.mxu0 0.0
    %242 = vmatpush1.msra.mxu0 0.0
    %243 = vmatprep.subr.mxu0 0.0
    %244 = vmatpush1.msra.mxu0 0.0
    %245 = vmatprep.subr.mxu0 0.0
    %246 = vmatpush1.msra.mxu0 0.0
    %247 = vmatprep.subr.mxu0 0.0
    %248 = vmatpush1.msra.mxu0 0.0
    %249 = vmatprep.subr.mxu0 0.0
    %250 = vmatpush1.msra.mxu0 0.0
    %251 = vmatprep.subr.mxu0 0.0
    %252 = vmatpush1.msra.mxu0 0.0
    %253 = vmatprep.subr.mxu0 0.0
    %254 = vmatpush1.msra.mxu0 0.0
    %255 = vmatprep.subr.mxu0 0.0
    %256 = vmatpush1.msra.mxu0 0.0
    %257 = vmatprep.subr.mxu0 0.0
    %258 = vmatpush1.msra.mxu0 0.0
    %259 = vmatprep.subr.mxu0 0.0
    %260 = vmatpush1.msra.mxu0 0.0
    %261 = vmatprep.subr.mxu0 0.0
    %262 = vmatpush1.msra.mxu0 0.0
    %263 = vmatprep.subr.mxu0 0.0
    %264 = vmatpush1.msra.mxu0 0.0
    %265 = vmatprep.subr.mxu0 0.0
    %266 = vmatpush1.msra.mxu0 0.0
    %267 = vmatprep.subr.mxu0 0.0
    %268 = vmatpush1.msra.mxu0 0.0
    %269 = vmatprep.subr.mxu0 0.0
    %270 = vmatpush1.msra.mxu0 0.0
    %271 = vmatprep.subr.mxu0 0.0
    %272 = vmatpush1.msra.mxu0 0.0
    %273 = vmatprep.subr.mxu0 0.0
    %274 = vmatpush1.msra.mxu0 0.0
    %275 = vmatprep.subr.mxu0 0.0
    %276 = vmatpush1.msra.mxu0 0.0
    %277 = vmatprep.subr.mxu0 0.0
    %278 = vmatpush1.msra.mxu0 0.0
    %279 = vmatprep.subr.mxu0 0.0
    %280 = vmatpush1.msra.mxu0 0.0
    %281 = vmatprep.subr.mxu0 0.0
    %282 = vmatpush1.msra.mxu0 0.0
    %283 = vmatprep.subr.mxu0 0.0
    %284 = vmatpush1.msra.mxu0 0.0
    %285 = vmatprep.subr.mxu0 0.0
    %286 = vmatpush1.msra.mxu0 0.0
    %287 = vmatprep.subr.mxu0 0.0
    %288 = vmatpush1.msra.mxu0 0.0
    %289 = vmatprep.subr.mxu0 0.0
    %290 = vmatpush1.msra.mxu0 0.0
    %291 = vmatprep.subr.mxu0 0.0
    %292 = vmatpush1.msra.mxu0 0.0
    %293 = vmatprep.mubr.f32.mxu0 0.0
    %294 = vmatmul.mubr.f32.gmra.mrb[0].mxu0 %v148
    %v295 = vpop.f32.mrb[0].mxu0
    %v296 = vadd.f32 %v227, %v295
    %v297 = vpop.f32.mrb[0].mxu0
    %298 = vdwg.mxu0
    %v299 = vld [vmem:[%s1] sm:$0xff]
    %v300 = vmul.f32 %v296, 0.5
    %v301 = vmul.f32 %v300, 1.442695
    %v302 = vpow.pop %v301
    %v303 = vmul.f32 %v299, %v302
    %v304 = vadd.f32 %v303, %v217
    %v305 = vld [vmem:[%s8] sm:$0xff]
    %v306 = vld [vmem:[%s9] sm:$0x1]
    %v308 = vlaneseq
    %v309 = vshrl.u32 %v308, 7
    %v310 = vsub.s32 0, %v309
    %v311 = vrot.slane %v306, %v310
    %vm313 = vcmask 64512
    %v315 = vsel %vm313, %v304, 0
    %317 = vmatprep.subr.mxu0 0.0
    %318 = vmatpush1.msra.mxu0 %v305
    %319 = vmatprep.subr.mxu0 0.0
    %320 = vmatpush1.msra.mxu0 0.0
    %321 = vmatprep.subr.mxu0 0.0
    %322 = vmatpush1.msra.mxu0 0.0
    %323 = vmatprep.subr.mxu0 0.0
    %324 = vmatpush1.msra.mxu0 0.0
    %325 = vmatprep.subr.mxu0 0.0
    %326 = vmatpush1.msra.mxu0 0.0
    %327 = vmatprep.subr.mxu0 0.0
    %328 = vmatpush1.msra.mxu0 0.0
    %329 = vmatprep.subr.mxu0 0.0
    %330 = vmatpush1.msra.mxu0 0.0
    %331 = vmatprep.subr.mxu0 0.0
    %332 = vmatpush1.msra.mxu0 0.0
    %333 = vmatprep.subr.mxu0 0.0
    %334 = vmatpush1.msra.mxu0 0.0
    %335 = vmatprep.subr.mxu0 0.0
    %336 = vmatpush1.msra.mxu0 0.0
    %337 = vmatprep.subr.mxu0 0.0
    %338 = vmatpush1.msra.mxu0 0.0
    %339 = vmatprep.subr.mxu0 0.0
    %340 = vmatpush1.msra.mxu0 0.0
    %341 = vmatprep.subr.mxu0 0.0
    %342 = vmatpush1.msra.mxu0 0.0
    %343 = vmatprep.subr.mxu0 0.0
    %344 = vmatpush1.msra.mxu0 0.0
    %345 = vmatprep.subr.mxu0 0.0
    %346 = vmatpush1.msra.mxu0 0.0
    %347 = vmatprep.subr.mxu0 0.0
    %348 = vmatpush1.msra.mxu0 0.0
    %349 = vmatprep.subr.mxu0 0.0
    %350 = vmatpush1.msra.mxu0 0.0
    %351 = vmatprep.subr.mxu0 0.0
    %352 = vmatpush1.msra.mxu0 0.0
    %353 = vmatprep.subr.mxu0 0.0
    %354 = vmatpush1.msra.mxu0 0.0
    %355 = vmatprep.subr.mxu0 0.0
    %356 = vmatpush1.msra.mxu0 0.0
    %357 = vmatprep.subr.mxu0 0.0
    %358 = vmatpush1.msra.mxu0 0.0
    %359 = vmatprep.subr.mxu0 0.0
    %360 = vmatpush1.msra.mxu0 0.0
    %361 = vmatprep.subr.mxu0 0.0
    %362 = vmatpush1.msra.mxu0 0.0
    %363 = vmatprep.subr.mxu0 0.0
    %364 = vmatpush1.msra.mxu0 0.0
    %365 = vmatprep.subr.mxu0 0.0
    %366 = vmatpush1.msra.mxu0 0.0
    %367 = vmatprep.subr.mxu0 0.0
    %368 = vmatpush1.msra.mxu0 0.0
    %369 = vmatprep.subr.mxu0 0.0
    %370 = vmatpush1.msra.mxu0 0.0
    %371 = vmatprep.subr.mxu0 0.0
    %372 = vmatpush1.msra.mxu0 0.0
    %373 = vmatprep.subr.mxu0 0.0
    %374 = vmatpush1.msra.mxu0 0.0
    %375 = vmatprep.subr.mxu0 0.0
    %376 = vmatpush1.msra.mxu0 0.0
    %377 = vmatprep.subr.mxu0 0.0
    %378 = vmatpush1.msra.mxu0 0.0
    %379 = vmatprep.subr.mxu0 0.0
    %380 = vmatpush1.msra.mxu0 0.0
    %381 = vmatprep.mubr.f32.mxu0 0.0
    %382 = vmatmul.mubr.f32.gmra.mrb[0].mxu0 %v315
    %v383 = vpop.f32.mrb[0].mxu0
    %v384 = vadd.f32 %v311, %v383
    %v385 = vpop.f32.mrb[0].mxu0
    %386 = vdwg.mxu0
    %vm387 = vcmp.gt.f32.partialorder %v384, 0.0
    %v388 = vmul.f32 %v384, 0.1
    %v389 = vsel %vm387, %v384, %v388
    %v390 = vld [vmem:[%s10] sm:$0xff]
    %v391 = vld [vmem:[%s10 + $0x8] sm:$0xff]
    %v392 = vld [vmem:[%s11] sm:$0x1]
    %v394 = vlaneseq
    %v395 = vshrl.u32 %v394, 7
    %v396 = vsub.s32 0, %v395
    %v397 = vrot.slane %v392, %v396
    %v400 = vsel %vm146, %v389, 0
    %402 = vmatprep.subr.mxu0 0.0
    %403 = vmatpush1.msra.mxu0 %v390
    %404 = vmatprep.subr.mxu0 0.0
    %405 = vmatpush1.msra.mxu0 %v391
    %406 = vmatprep.subr.mxu0 0.0
    %407 = vmatpush1.msra.mxu0 0.0
    %408 = vmatprep.subr.mxu0 0.0
    %409 = vmatpush1.msra.mxu0 0.0
    %410 = vmatprep.subr.mxu0 0.0
    %411 = vmatpush1.msra.mxu0 0.0
    %412 = vmatprep.subr.mxu0 0.0
    %413 = vmatpush1.msra.mxu0 0.0
    %414 = vmatprep.subr.mxu0 0.0
    %415 = vmatpush1.msra.mxu0 0.0
    %416 = vmatprep.subr.mxu0 0.0
    %417 = vmatpush1.msra.mxu0 0.0
    %418 = vmatprep.subr.mxu0 0.0
    %419 = vmatpush1.msra.mxu0 0.0
    %420 = vmatprep.subr.mxu0 0.0
    %421 = vmatpush1.msra.mxu0 0.0
    %422 = vmatprep.subr.mxu0 0.0
    %423 = vmatpush1.msra.mxu0 0.0
    %424 = vmatprep.subr.mxu0 0.0
    %425 = vmatpush1.msra.mxu0 0.0
    %426 = vmatprep.subr.mxu0 0.0
    %427 = vmatpush1.msra.mxu0 0.0
    %428 = vmatprep.subr.mxu0 0.0
    %429 = vmatpush1.msra.mxu0 0.0
    %430 = vmatprep.subr.mxu0 0.0
    %431 = vmatpush1.msra.mxu0 0.0
    %432 = vmatprep.subr.mxu0 0.0
    %433 = vmatpush1.msra.mxu0 0.0
    %434 = vmatprep.subr.mxu0 0.0
    %435 = vmatpush1.msra.mxu0 0.0
    %436 = vmatprep.subr.mxu0 0.0
    %437 = vmatpush1.msra.mxu0 0.0
    %438 = vmatprep.subr.mxu0 0.0
    %439 = vmatpush1.msra.mxu0 0.0
    %440 = vmatprep.subr.mxu0 0.0
    %441 = vmatpush1.msra.mxu0 0.0
    %442 = vmatprep.subr.mxu0 0.0
    %443 = vmatpush1.msra.mxu0 0.0
    %444 = vmatprep.subr.mxu0 0.0
    %445 = vmatpush1.msra.mxu0 0.0
    %446 = vmatprep.subr.mxu0 0.0
    %447 = vmatpush1.msra.mxu0 0.0
    %448 = vmatprep.subr.mxu0 0.0
    %449 = vmatpush1.msra.mxu0 0.0
    %450 = vmatprep.subr.mxu0 0.0
    %451 = vmatpush1.msra.mxu0 0.0
    %452 = vmatprep.subr.mxu0 0.0
    %453 = vmatpush1.msra.mxu0 0.0
    %454 = vmatprep.subr.mxu0 0.0
    %455 = vmatpush1.msra.mxu0 0.0
    %456 = vmatprep.subr.mxu0 0.0
    %457 = vmatpush1.msra.mxu0 0.0
    %458 = vmatprep.subr.mxu0 0.0
    %459 = vmatpush1.msra.mxu0 0.0
    %460 = vmatprep.subr.mxu0 0.0
    %461 = vmatpush1.msra.mxu0 0.0
    %462 = vmatprep.subr.mxu0 0.0
    %463 = vmatpush1.msra.mxu0 0.0
    %464 = vmatprep.subr.mxu0 0.0
    %465 = vmatpush1.msra.mxu0 0.0
    %466 = vmatprep.mubr.f32.mxu0 0.0
    %467 = vmatmul.mubr.f32.gmra.mrb[0].mxu0 %v400
    %v468 = vpop.f32.mrb[0].mxu0
    %v469 = vadd.f32 %v397, %v468
    %v470 = vpop.f32.mrb[0].mxu0
    %471 = vdwg.mxu0
    %472 = vst.msk [vmem:[#allocation2] sm:$0xff] %vm60, %v469
    %473 = vst.msk [vmem:[#allocation4] sm:$0xff] %vm313, %v217
    %474 = vst.msk [vmem:[#allocation6] sm:$0xff] %vm313, %v296
    %475 = vst.msk [vmem:[#allocation7] sm:$0xff] %vm313, %v304
    // Predicated region
    $region50: #{tpu_custom_call.1} parent=1 // pred_check
      _
    $region51: #{tpu_custom_call.1} parent=1 // pred_check_branch
      %477 = sbr.rel (0) target = $region53
    $region52: #{tpu_custom_call.1} parent=1 // pred_region
      %s479 = ssub.s32 128, 128
      %480 = vsyncadd [#allocation3], %s479
      %s482 = sshll.u32 [#allocation2], 4
      %s483 = int_to_ptr.vmem [resolvable:$true] %s482
      %485 = dma.vmem_to_hbm [thread:$0]  %s483, 128, %s12, [#allocation3]
    $region53: #{tpu_custom_call.1} parent=1 // pred_fallthru
      _
    // Predicated region
    $region54: #{tpu_custom_call.1} parent=1 // pred_check
      _
    $region55: #{tpu_custom_call.1} parent=1 // pred_check_branch
      %487 = sbr.rel (0) target = $region57
    $region56: #{tpu_custom_call.1} parent=1 // pred_region
      %s489 = ssub.s32 128, 128
      %490 = vsyncadd [#allocation5], %s489
      %s492 = sshll.u32 [#allocation4], 4
      %s493 = int_to_ptr.vmem [resolvable:$true] %s492
      %495 = dma.vmem_to_hbm [thread:$0]  %s493, 128, %s13, [#allocation5]
    $region57: #{tpu_custom_call.1} parent=1 // pred_fallthru
      _
    // Predicated region
    $region58: #{tpu_custom_call.1} parent=1 // pred_check
      _
    $region59: #{tpu_custom_call.1} parent=1 // pred_check_branch
      %497 = sbr.rel (0) target = $region61
    $region60: #{tpu_custom_call.1} parent=1 // pred_region
      %s499 = ssub.s32 128, 128
      %500 = vsyncadd [#allocation5], %s499
      %s502 = sshll.u32 [#allocation6], 4
      %s503 = int_to_ptr.vmem [resolvable:$true] %s502
      %505 = dma.vmem_to_hbm [thread:$0]  %s503, 128, %s14, [#allocation5]
    $region61: #{tpu_custom_call.1} parent=1 // pred_fallthru
      _
    // Predicated region
    $region62: #{tpu_custom_call.1} parent=1 // pred_check
      _
    $region63: #{tpu_custom_call.1} parent=1 // pred_check_branch
      %507 = sbr.rel (0) target = $region65
    $region64: #{tpu_custom_call.1} parent=1 // pred_region
      %s509 = ssub.s32 128, 128
      %510 = vsyncadd [#allocation8], %s509
      %s512 = sshll.u32 [#allocation7], 4
      %s513 = int_to_ptr.vmem [resolvable:$true] %s512
      %515 = dma.vmem_to_hbm [thread:$0]  %s513, 128, %s15, [#allocation8]
    $region65: #{tpu_custom_call.1} parent=1 // pred_fallthru
      _
    // Predicated region
    $region66: #{tpu_custom_call.1} parent=1 // pred_check
      _
    $region67: #{tpu_custom_call.1} parent=1 // pred_check_branch
      %517 = sbr.rel (0) target = $region69
    $region68: #{tpu_custom_call.1} parent=1 // pred_region
      %518 = dma.done [#allocation3], 128
    $region69: #{tpu_custom_call.1} parent=1 // pred_fallthru
      _
    // Predicated region
    $region70: #{tpu_custom_call.1} parent=1 // pred_check
      _
    $region71: #{tpu_custom_call.1} parent=1 // pred_check_branch
      %520 = sbr.rel (0) target = $region73
    $region72: #{tpu_custom_call.1} parent=1 // pred_region
      %521 = dma.done [#allocation5], 128
    $region73: #{tpu_custom_call.1} parent=1 // pred_fallthru
      _
    // Predicated region
    $region74: #{tpu_custom_call.1} parent=1 // pred_check
      _
    $region75: #{tpu_custom_call.1} parent=1 // pred_check_branch
      %523 = sbr.rel (0) target = $region77
    $region76: #{tpu_custom_call.1} parent=1 // pred_region
      %524 = dma.done [#allocation5], 128
    $region77: #{tpu_custom_call.1} parent=1 // pred_fallthru
      _
    // Predicated region
    $region78: #{tpu_custom_call.1} parent=1 // pred_check
      _
    $region79: #{tpu_custom_call.1} parent=1 // pred_check_branch
      %526 = sbr.rel (0) target = $region81
    $region80: #{tpu_custom_call.1} parent=1 // pred_region
      %527 = dma.done [#allocation8], 128
    $region81: #{tpu_custom_call.1} parent=1 // pred_fallthru
      _
    %528 = vsyncpa [#allocation3], 1
    %529 = vsyncpa [#allocation5], 1
    %530 = vsyncpa [#allocation8], 1

</llo_original>
